<compile_context>
chip_gen: v6e
topology: v6e:2x2x1
jax: 0.10.0
libtpu: 0.0.40
codegen_flags: <defaults>
</compile_context>

<pallas_src>
import jax
import jax.numpy as jnp
from jax.experimental import pallas as pl
from jax.experimental.pallas import tpu as pltpu


def _contrastive_sim_kernel(x1_ref, x2_ref,
                            w1_ref, b1_ref,
                            w2_ref, b2_ref,
                            w3_ref, b3_ref,
                            out_ref, xbuf):
    """Encode G pairs in one MLP pass; emit one (G, 1) block of similarities."""
    gb = x1_ref.shape[0]                 # G * B rows per side (static)
    g = out_ref.shape[0]                 # pairs handled this grid step
    b = gb // g                          # per-pair batch (== x1.shape[0] in torch)

    # Stack the two sides into one (2*G*B, in_dim) operand -> single MLP pass
    # (halves MXU pushes, fills 2*G*B = 128 MXU rows at the default config).
    xbuf[0:gb, :] = x1_ref[...]
    xbuf[gb:2 * gb, :] = x2_ref[...]
    x = xbuf[...]

    # Shared 3-layer MLP. f32 operands; accumulate in f32 on the MXU.
    # NOTE(review): default MXU precision accepted deliberately (bf16 passes);
    # the plain-JAX reference uses the same default, see tolerance in __main__.
    h = jnp.dot(x, w1_ref[...], preferred_element_type=jnp.float32)
    h = jnp.maximum(h + b1_ref[...], 0.0)
    h = jnp.dot(h, w2_ref[...], preferred_element_type=jnp.float32)
    h = jnp.maximum(h + b2_ref[...], 0.0)
    z = jnp.dot(h, w3_ref[...], preferred_element_type=jnp.float32) + b3_ref[...]

    z1 = z[0:gb, :]                      # enc(x1) rows, (G*B, out_dim)
    z2 = z[gb:2 * gb, :]                 # enc(x2) rows

    # Per-pair dot: VPU multiply + lane reduce + sublane reduce (no matmul,
    # no minor-dim reshape — the (G*B, D) -> (G, B, D) split is tile-aligned).
    prod = (z1 * z2).reshape(g, b, z.shape[-1])
    per_row = jnp.sum(prod, axis=2)                       # (G, B)
    per_pair = jnp.sum(per_row, axis=1, keepdims=True)    # (G, 1)
    out_ref[...] = per_pair * (1.0 / b)


def contrastive_sim_pairs(x1_pairs, x2_pairs, params, *, pairs_per_step=8):
    """Batched forward: x*_pairs is (P, B, in_dim); returns (P,) similarities.

    P independent ContrastiveSim.forward calls amortized over one pallas_call:
    per-step x blocks are pipelined, weights stay VMEM-resident, and the pair
    axis is marked "parallel" (megacore on v7x).
    """
    assert x1_pairs.shape == x2_pairs.shape, "x1/x2 must have equal shapes"
    p, b, in_dim = x1_pairs.shape
    g = min(pairs_per_step, p)
    assert p % g == 0, "num_pairs must be a multiple of pairs_per_step"
    assert g % 8 == 0 or g == p, "pairs_per_step must be a multiple of 8 (or == P)"
    assert (g * b) % 8 == 0 or g == p, "G*B must be sublane (8) aligned"

    w1, b1, w2, b2, w3, b3 = params

    # Row-stacked views (metadata-only reshape; no extra HBM round trip).
    x1_rows = x1_pairs.reshape(p * b, in_dim)
    x2_rows = x2_pairs.reshape(p * b, in_dim)

    def resident(shape):                 # weight stays in VMEM across the grid
        return pl.BlockSpec(shape, lambda i: (0, 0))

    out = pl.pallas_call(
        _contrastive_sim_kernel,
        out_shape=jax.ShapeDtypeStruct((p, 1), jnp.float32),
        grid=(p // g,),
        in_specs=[
            pl.BlockSpec((g * b, in_dim), lambda i: (i, 0)),   # x1 rows, pipelined
            pl.BlockSpec((g * b, in_dim), lambda i: (i, 0)),   # x2 rows, pipelined
            resident(w1.shape), resident(b1.shape),
            resident(w2.shape), resident(b2.shape),
            resident(w3.shape), resident(b3.shape),
        ],
        out_specs=pl.BlockSpec((g, 1), lambda i: (i, 0)),
        scratch_shapes=[pltpu.VMEM((2 * g * b, in_dim), jnp.float32)],
        compiler_params=pltpu.CompilerParams(
            dimension_semantics=("parallel",)),
    )(x1_rows, x2_rows, w1, b1, w2, b2, w3, b3)
    return out[:, 0]


def contrastive_sim(x1, x2, params):
    """Exact ContrastiveSim.forward for a single (x1, x2) pair -> scalar."""
    assert x1.shape == x2.shape, "x1/x2 must have equal batch/shape"
    return contrastive_sim_pairs(x1[None], x2[None], params, pairs_per_step=1)[0]


def init_params(key, in_dim, mid_layers, out_dim):
    """Deterministic synthetic MLP parameters (weights stored (in, out))."""
    dims = [in_dim] + list(mid_layers) + [out_dim]
    params = []
    for i in range(len(dims) - 1):
        key, kw, kb = jax.random.split(key, 3)
        scale = 1.0 / jnp.sqrt(jnp.float32(dims[i]))
        w = jax.random.uniform(kw, (dims[i], dims[i + 1]), jnp.float32, -scale, scale)
        bb = jax.random.uniform(kb, (1, dims[i + 1]), jnp.float32, -scale, scale)
        params += [w, bb]
    return tuple(params)


def _encode_ref(x, params):
    w1, b1, w2, b2, w3, b3 = params
    h = jnp.maximum(x @ w1 + b1, 0.0)
    h = jnp.maximum(h @ w2 + b2, 0.0)
    return h @ w3 + b3


def reference_pairs(x1_pairs, x2_pairs, params):
    """Plain-JAX reference (one ContrastiveSim.forward per pair)."""
    def one(x1, x2):
        z1, z2 = _encode_ref(x1, params), _encode_ref(x2, params)
        return jnp.dot(z1.reshape(-1), z2.reshape(-1)) / x1.shape[0]
    return jax.vmap(one)(x1_pairs, x2_pairs)


if __name__ == "__main__":
    in_dim, out_dim = 32, 16
    mid_layers = (64, 64)
    batch = 8          # rows per pair (x1.shape[0] in the torch module)
    num_pairs = 32     # independent (x1, x2) pairs batched into one pallas_call

    key = jax.random.PRNGKey(0)
    key, k1, k2 = jax.random.split(key, 3)
    x1 = jax.random.normal(k1, (num_pairs, batch, in_dim), jnp.float32)
    x2 = jax.random.normal(k2, (num_pairs, batch, in_dim), jnp.float32)
    params = init_params(key, in_dim, mid_layers, out_dim)

    out = jax.block_until_ready(contrastive_sim_pairs(x1, x2, params))
    ref = jax.block_until_ready(reference_pairs(x1, x2, params))
    assert out.shape == (num_pairs,)
    # Tolerance covers default MXU precision (bf16 passes) on both paths.
    assert jnp.allclose(out, ref, rtol=1e-3, atol=1e-3), (out, ref)

    # Single-pair path == the module's forward(x1, x2).
    single = jax.block_until_ready(contrastive_sim(x1[0], x2[0], params))
    assert jnp.allclose(single, ref[0], rtol=1e-3, atol=1e-3), (single, ref[0])

    print("KERNEL_OK")
</pallas_src>

<mosaic_0001>
module attributes {stable_mosaic.version = 11 : i64} {
  func.func @_contrastive_sim_kernel(%arg0: i32, %arg1: memref<64x32xf32, #tpu.memory_space<vmem>>, %arg2: memref<64x32xf32, #tpu.memory_space<vmem>>, %arg3: memref<32x64xf32, #tpu.memory_space<vmem>>, %arg4: memref<1x64xf32, #tpu.memory_space<vmem>>, %arg5: memref<64x64xf32, #tpu.memory_space<vmem>>, %arg6: memref<1x64xf32, #tpu.memory_space<vmem>>, %arg7: memref<64x16xf32, #tpu.memory_space<vmem>>, %arg8: memref<1x16xf32, #tpu.memory_space<vmem>>, %arg9: memref<8x1xf32, #tpu.memory_space<vmem>>, %arg10: memref<128x32xf32, #tpu.memory_space<vmem>>) attributes {dimension_semantics = [#tpu.dimension_semantics<parallel>], iteration_bounds = array<i64: 4>, scalar_prefetch = 0 : i64, scratch_operands = 1 : i64, tpu.core_type = #tpu.core_type<tc>, window_params = [{transform_indices = @transform_0, window_bounds = array<i64: 64, 32>}, {transform_indices = @transform_1, window_bounds = array<i64: 64, 32>}, {pipeline_mode = #tpu.pipeline_mode<synchronous>, transform_indices = @transform_2, window_bounds = array<i64: 32, 64>}, {pipeline_mode = #tpu.pipeline_mode<synchronous>, transform_indices = @transform_3, window_bounds = array<i64: 1, 64>}, {pipeline_mode = #tpu.pipeline_mode<synchronous>, transform_indices = @transform_4, window_bounds = array<i64: 64, 64>}, {pipeline_mode = #tpu.pipeline_mode<synchronous>, transform_indices = @transform_5, window_bounds = array<i64: 1, 64>}, {pipeline_mode = #tpu.pipeline_mode<synchronous>, transform_indices = @transform_6, window_bounds = array<i64: 64, 16>}, {pipeline_mode = #tpu.pipeline_mode<synchronous>, transform_indices = @transform_7, window_bounds = array<i64: 1, 16>}, {transform_indices = @transform_8, window_bounds = array<i64: 8, 1>}]} {
    %c0 = arith.constant 0 : index
    %c0_0 = arith.constant 0 : index
    %0 = vector.load %arg1[%c0, %c0_0] : memref<64x32xf32, #tpu.memory_space<vmem>>, vector<64x32xf32>
    %c0_1 = arith.constant 0 : index
    %c0_2 = arith.constant 0 : index
    %1 = vector.load %arg10[%c0_1, %c0_2] : memref<128x32xf32, #tpu.memory_space<vmem>>, vector<64x32xf32>
    tpu.vector_store %arg10[%c0_1, %c0_2], %0 {strides = array<i32>} : memref<128x32xf32, #tpu.memory_space<vmem>>, vector<64x32xf32>,
    %c0_3 = arith.constant 0 : index
    %c0_4 = arith.constant 0 : index
    %2 = vector.load %arg2[%c0_3, %c0_4] : memref<64x32xf32, #tpu.memory_space<vmem>>, vector<64x32xf32>
    %c64 = arith.constant 64 : index
    %c0_5 = arith.constant 0 : index
    %3 = vector.load %arg10[%c64, %c0_5] : memref<128x32xf32, #tpu.memory_space<vmem>>, vector<64x32xf32>
    tpu.vector_store %arg10[%c64, %c0_5], %2 {strides = array<i32>} : memref<128x32xf32, #tpu.memory_space<vmem>>, vector<64x32xf32>,
    %c0_6 = arith.constant 0 : index
    %c0_7 = arith.constant 0 : index
    %4 = vector.load %arg10[%c0_6, %c0_7] : memref<128x32xf32, #tpu.memory_space<vmem>>, vector<128x32xf32>
    %c0_8 = arith.constant 0 : index
    %c0_9 = arith.constant 0 : index
    %5 = vector.load %arg3[%c0_8, %c0_9] : memref<32x64xf32, #tpu.memory_space<vmem>>, vector<32x64xf32>
    %cst = arith.constant dense<0.000000e+00> : vector<128x64xf32>
    %6 = tpu.matmul %4, %5, %cst {dimension_numbers = #tpu.dot_dimension_numbers<[1], [0], [0], [1], [0, 0, 1, 1], [], []>} : vector<128x32xf32>, vector<32x64xf32>, vector<128x64xf32> -> vector<128x64xf32>
    %c0_10 = arith.constant 0 : index
    %c0_11 = arith.constant 0 : index
    %7 = vector.load %arg4[%c0_10, %c0_11] : memref<1x64xf32, #tpu.memory_space<vmem>>, vector<1x64xf32>
    %8 = vector.broadcast %7 : vector<1x64xf32> to vector<128x64xf32>
    %9 = arith.addf %6, %8 : vector<128x64xf32>
    %cst_12 = arith.constant 0.000000e+00 : f32
    %10 = vector.broadcast %cst_12 : f32 to vector<128x64xf32>
    %11 = arith.maximumf %9, %10 : vector<128x64xf32>
    %c0_13 = arith.constant 0 : index
    %c0_14 = arith.constant 0 : index
    %12 = vector.load %arg5[%c0_13, %c0_14] : memref<64x64xf32, #tpu.memory_space<vmem>>, vector<64x64xf32>
    %cst_15 = arith.constant dense<0.000000e+00> : vector<128x64xf32>
    %13 = tpu.matmul %11, %12, %cst_15 {dimension_numbers = #tpu.dot_dimension_numbers<[1], [0], [0], [1], [0, 0, 1, 1], [], []>} : vector<128x64xf32>, vector<64x64xf32>, vector<128x64xf32> -> vector<128x64xf32>
    %c0_16 = arith.constant 0 : index
    %c0_17 = arith.constant 0 : index
    %14 = vector.load %arg6[%c0_16, %c0_17] : memref<1x64xf32, #tpu.memory_space<vmem>>, vector<1x64xf32>
    %15 = vector.broadcast %14 : vector<1x64xf32> to vector<128x64xf32>
    %16 = arith.addf %13, %15 : vector<128x64xf32>
    %cst_18 = arith.constant 0.000000e+00 : f32
    %17 = vector.broadcast %cst_18 : f32 to vector<128x64xf32>
    %18 = arith.maximumf %16, %17 : vector<128x64xf32>
    %c0_19 = arith.constant 0 : index
    %c0_20 = arith.constant 0 : index
    %19 = vector.load %arg7[%c0_19, %c0_20] : memref<64x16xf32, #tpu.memory_space<vmem>>, vector<64x16xf32>
    %cst_21 = arith.constant dense<0.000000e+00> : vector<128x16xf32>
    %20 = tpu.matmul %18, %19, %cst_21 {dimension_numbers = #tpu.dot_dimension_numbers<[1], [0], [0], [1], [0, 0, 1, 1], [], []>} : vector<128x64xf32>, vector<64x16xf32>, vector<128x16xf32> -> vector<128x16xf32>
    %c0_22 = arith.constant 0 : index
    %c0_23 = arith.constant 0 : index
    %21 = vector.load %arg8[%c0_22, %c0_23] : memref<1x16xf32, #tpu.memory_space<vmem>>, vector<1x16xf32>
    %22 = vector.broadcast %21 : vector<1x16xf32> to vector<128x16xf32>
    %23 = arith.addf %20, %22 : vector<128x16xf32>
    %24 = vector.extract_strided_slice %23 {offsets = [0, 0], sizes = [64, 16], strides = [1, 1]} : vector<128x16xf32> to vector<64x16xf32>
    %25 = vector.extract_strided_slice %23 {offsets = [64, 0], sizes = [64, 16], strides = [1, 1]} : vector<128x16xf32> to vector<64x16xf32>
    %26 = arith.mulf %24, %25 : vector<64x16xf32>
    %27 = vector.shape_cast %26 : vector<64x16xf32> to vector<8x8x16xf32>
    %cst_24 = arith.constant dense<0.000000e+00> : vector<8x8xf32>
    %28 = vector.multi_reduction <add>, %27, %cst_24 [2] : vector<8x8x16xf32> to vector<8x8xf32>
    %cst_25 = arith.constant dense<0.000000e+00> : vector<8xf32>
    %29 = vector.multi_reduction <add>, %28, %cst_25 [1] : vector<8x8xf32> to vector<8xf32>
    %30 = vector.shape_cast %29 : vector<8xf32> to vector<8x1xf32>
    %cst_26 = arith.constant 1.250000e-01 : f32
    %31 = vector.broadcast %cst_26 : f32 to vector<8x1xf32>
    %32 = arith.mulf %30, %31 : vector<8x1xf32>
    %c0_27 = arith.constant 0 : index
    %c0_28 = arith.constant 0 : index
    %33 = vector.load %arg9[%c0_27, %c0_28] : memref<8x1xf32, #tpu.memory_space<vmem>>, vector<8x1xf32>
    tpu.vector_store %arg9[%c0_27, %c0_28], %32 {strides = array<i32>} : memref<8x1xf32, #tpu.memory_space<vmem>>, vector<8x1xf32>,
    return
  }
  func.func @transform_0(%arg0: i32) -> (i32, i32) {
    %c0_i32 = arith.constant 0 : i32
    %c0_i32_0 = arith.constant 0 : i32
    return %arg0, %c0_i32 : i32, i32
  }
  func.func @transform_1(%arg0: i32) -> (i32, i32) {
    %c0_i32 = arith.constant 0 : i32
    %c0_i32_0 = arith.constant 0 : i32
    return %arg0, %c0_i32 : i32, i32
  }
  func.func @transform_2(%arg0: i32) -> (i32, i32) {
    %c0_i32 = arith.constant 0 : i32
    %c0_i32_0 = arith.constant 0 : i32
    %c0_i32_1 = arith.constant 0 : i32
    return %c0_i32, %c0_i32_0 : i32, i32
  }
  func.func @transform_3(%arg0: i32) -> (i32, i32) {
    %c0_i32 = arith.constant 0 : i32
    %c0_i32_0 = arith.constant 0 : i32
    %c0_i32_1 = arith.constant 0 : i32
    return %c0_i32, %c0_i32_0 : i32, i32
  }
  func.func @transform_4(%arg0: i32) -> (i32, i32) {
    %c0_i32 = arith.constant 0 : i32
    %c0_i32_0 = arith.constant 0 : i32
    %c0_i32_1 = arith.constant 0 : i32
    return %c0_i32, %c0_i32_0 : i32, i32
  }
  func.func @transform_5(%arg0: i32) -> (i32, i32) {
    %c0_i32 = arith.constant 0 : i32
    %c0_i32_0 = arith.constant 0 : i32
    %c0_i32_1 = arith.constant 0 : i32
    return %c0_i32, %c0_i32_0 : i32, i32
  }
  func.func @transform_6(%arg0: i32) -> (i32, i32) {
    %c0_i32 = arith.constant 0 : i32
    %c0_i32_0 = arith.constant 0 : i32
    %c0_i32_1 = arith.constant 0 : i32
    return %c0_i32, %c0_i32_0 : i32, i32
  }
  func.func @transform_7(%arg0: i32) -> (i32, i32) {
    %c0_i32 = arith.constant 0 : i32
    %c0_i32_0 = arith.constant 0 : i32
    %c0_i32_1 = arith.constant 0 : i32
    return %c0_i32, %c0_i32_0 : i32, i32
  }
  func.func @transform_8(%arg0: i32) -> (i32, i32) {
    %c0_i32 = arith.constant 0 : i32
    %c0_i32_0 = arith.constant 0 : i32
    return %arg0, %c0_i32 : i32, i32
  }
}

</mosaic_0001>

<llo_original>
// kernel: tpu_custom_call.1
$region0: #{tpu_custom_call.1}
  #allocation0 [shape = 'u32[]', space=smem, size = 0x4, offset = 0x4, fixed_abs, tag = 'smem constant byte address 0x4 - core index']
  #allocation1 [shape = 'u32[144,128]{1,0:T(1,128)}', space=vmem, size = 0x12000, scoped, tag = 'internal scratch']
  #allocation2 [shape = 'f32[128,32]{1,0:T(8,128)}', space=vmem, size = 0x10000, scoped, tag = 'scratch operand']
  %s0 = inlined_call_operand.vmem [shape: f32[256,32], index: 0, kind: input, shape index: {}]
  %s1 = inlined_call_operand.vmem [shape: f32[256,32], index: 1, kind: input, shape index: {}]
  %s2 = inlined_call_operand.vmem [shape: f32[32,64], index: 2, kind: input, shape index: {}]
  %s3 = inlined_call_operand.vmem [shape: f32[1,64], index: 3, kind: input, shape index: {}]
  %s4 = inlined_call_operand.vmem [shape: f32[64,64], index: 4, kind: input, shape index: {}]
  %s5 = inlined_call_operand.vmem [shape: f32[1,64], index: 5, kind: input, shape index: {}]
  %s6 = inlined_call_operand.vmem [shape: f32[64,16], index: 6, kind: input, shape index: {}]
  %s7 = inlined_call_operand.vmem [shape: f32[1,16], index: 7, kind: input, shape index: {}]
  %s8 = inlined_call_operand.vmem [shape: f32[32,1], index: 8, kind: output, shape index: {}]
  %s9 = sld [smem:[#allocation0]]
  $region65: #{tpu_custom_call.1} parent=0
    _
  %s11 = ssub.s32 1, %s9
  %s12 = scalar_select 0, %s11, %s9
  loop: start=0, step=1, limit=6
  $region2: #{tpu_custom_call.1} parent=0 // loop_pre_header
    _
  $region3: #{tpu_custom_call.1} parent=0 // loop_header
    %s14 = sphi 0, %s18
    %p15 = scmp.ge.s32.totalorder %s14, 6
    %s24 = sphi 0, %s26
    %s27 = sphi 0, %s24
    %s28 = sphi 0, %s27
    %s44 = sphi 0, %s28
    %s50 = sphi 0, %s52
    %s53 = sphi 0, %s50
    %s54 = sphi 0, %s53
    %s70 = sphi 0, %s54
    %s74 = sphi 0, %s74
    %s76 = sphi 0, %s74
    %s77 = sphi 0, %s76
    %s91 = sphi 0, %s77
    %s95 = sphi 0, %s95
    %s97 = sphi 0, %s95
    %s98 = sphi 0, %s97
    %s112 = sphi 0, %s98
    %s116 = sphi 0, %s116
    %s118 = sphi 0, %s116
    %s119 = sphi 0, %s118
    %s133 = sphi 0, %s119
    %s137 = sphi 0, %s137
    %s139 = sphi 0, %s137
    %s140 = sphi 0, %s139
    %s154 = sphi 0, %s140
    %s158 = sphi 0, %s158
    %s160 = sphi 0, %s158
    %s161 = sphi 0, %s160
    %s175 = sphi 0, %s161
    %s179 = sphi 0, %s179
    %s181 = sphi 0, %s179
    %s182 = sphi 0, %s181
    %s196 = sphi 0, %s182
    %s202 = sphi 0, %s204
    %s205 = sphi 0, %s202
    %s206 = sphi 0, %s205
    %s222 = sphi 0, %s206
  $region4: #{tpu_custom_call.1} parent=0 // loop_header_branch
    %17 = sbr.rel (%p15) target = $region8
  $region5: #{tpu_custom_call.1} parent=0 // loop_body
    %s19 = ssub.s32 %s14, 1
    %s20 = ssub.s32 %s14, 2
    %s21 = sadd.s32 %s14, 1
    %s22 = ssub.s32 %s14, %s21
    %p23 = scmp.eq.s32.totalorder %s22, 0
    %s25 = sadd.s32 %s24, 1
    %s26 = scalar_select %p23, %s24, %s25
    %p29 = pneg %p23
    %p30 = scmp.eq.s32.totalorder %s14, 3
    %p31 = por %p29, %p30
    %p32 = scmp.ne.s32.totalorder %s24, %s27
    %p33 = scmp.eq.s32.totalorder %s14, 0
    %p34 = por %p32, %p33
    %p35 = scmp.ne.s32.totalorder %s24, %s27
    %p36 = scmp.eq.s32.totalorder %s19, 3
    %p37 = por %p35, %p36
    %p38 = scmp.ne.s32.totalorder %s27, %s28
    %p39 = scmp.eq.s32.totalorder %s19, 0
    %p40 = por %p38, %p39
    %p41 = scmp.ne.s32.totalorder %s27, %s28
    %p42 = scmp.eq.s32.totalorder %s20, 3
    %p43 = por %p41, %p42
    %p45 = scmp.ne.s32.totalorder %s28, %s44
    %p46 = scmp.eq.s32.totalorder %s20, 0
    %p47 = por %p45, %p46
    %s48 = ssub.s32 %s14, %s21
    %p49 = scmp.eq.s32.totalorder %s48, 0
    %s51 = sadd.s32 %s50, 1
    %s52 = scalar_select %p49, %s50, %s51
    %p55 = pneg %p49
    %p56 = scmp.eq.s32.totalorder %s14, 3
    %p57 = por %p55, %p56
    %p58 = scmp.ne.s32.totalorder %s50, %s53
    %p59 = scmp.eq.s32.totalorder %s14, 0
    %p60 = por %p58, %p59
    %p61 = scmp.ne.s32.totalorder %s50, %s53
    %p62 = scmp.eq.s32.totalorder %s19, 3
    %p63 = por %p61, %p62
    %p64 = scmp.ne.s32.totalorder %s53, %s54
    %p65 = scmp.eq.s32.totalorder %s19, 0
    %p66 = por %p64, %p65
    %p67 = scmp.ne.s32.totalorder %s53, %s54
    %p68 = scmp.eq.s32.totalorder %s20, 3
    %p69 = por %p67, %p68
    %p71 = scmp.ne.s32.totalorder %s54, %s70
    %p72 = scmp.eq.s32.totalorder %s20, 0
    %p73 = por %p71, %p72
    %s75 = sadd.s32 %s74, 1
    %p78 = scmp.eq.s32.totalorder %s14, 3
    %p79 = scmp.ne.s32.totalorder %s74, %s76
    %p80 = scmp.eq.s32.totalorder %s14, 0
    %p81 = por %p79, %p80
    %p82 = scmp.ne.s32.totalorder %s74, %s76
    %p83 = scmp.eq.s32.totalorder %s19, 3
    %p84 = por %p82, %p83
    %p85 = scmp.ne.s32.totalorder %s76, %s77
    %p86 = scmp.eq.s32.totalorder %s19, 0
    %p87 = por %p85, %p86
    %p88 = scmp.ne.s32.totalorder %s76, %s77
    %p89 = scmp.eq.s32.totalorder %s20, 3
    %p90 = por %p88, %p89
    %p92 = scmp.ne.s32.totalorder %s77, %s91
    %p93 = scmp.eq.s32.totalorder %s20, 0
    %p94 = por %p92, %p93
    %s96 = sadd.s32 %s95, 1
    %p99 = scmp.eq.s32.totalorder %s14, 3
    %p100 = scmp.ne.s32.totalorder %s95, %s97
    %p101 = scmp.eq.s32.totalorder %s14, 0
    %p102 = por %p100, %p101
    %p103 = scmp.ne.s32.totalorder %s95, %s97
    %p104 = scmp.eq.s32.totalorder %s19, 3
    %p105 = por %p103, %p104
    %p106 = scmp.ne.s32.totalorder %s97, %s98
    %p107 = scmp.eq.s32.totalorder %s19, 0
    %p108 = por %p106, %p107
    %p109 = scmp.ne.s32.totalorder %s97, %s98
    %p110 = scmp.eq.s32.totalorder %s20, 3
    %p111 = por %p109, %p110
    %p113 = scmp.ne.s32.totalorder %s98, %s112
    %p114 = scmp.eq.s32.totalorder %s20, 0
    %p115 = por %p113, %p114
    %s117 = sadd.s32 %s116, 1
    %p120 = scmp.eq.s32.totalorder %s14, 3
    %p121 = scmp.ne.s32.totalorder %s116, %s118
    %p122 = scmp.eq.s32.totalorder %s14, 0
    %p123 = por %p121, %p122
    %p124 = scmp.ne.s32.totalorder %s116, %s118
    %p125 = scmp.eq.s32.totalorder %s19, 3
    %p126 = por %p124, %p125
    %p127 = scmp.ne.s32.totalorder %s118, %s119
    %p128 = scmp.eq.s32.totalorder %s19, 0
    %p129 = por %p127, %p128
    %p130 = scmp.ne.s32.totalorder %s118, %s119
    %p131 = scmp.eq.s32.totalorder %s20, 3
    %p132 = por %p130, %p131
    %p134 = scmp.ne.s32.totalorder %s119, %s133
    %p135 = scmp.eq.s32.totalorder %s20, 0
    %p136 = por %p134, %p135
    %s138 = sadd.s32 %s137, 1
    %p141 = scmp.eq.s32.totalorder %s14, 3
    %p142 = scmp.ne.s32.totalorder %s137, %s139
    %p143 = scmp.eq.s32.totalorder %s14, 0
    %p144 = por %p142, %p143
    %p145 = scmp.ne.s32.totalorder %s137, %s139
    %p146 = scmp.eq.s32.totalorder %s19, 3
    %p147 = por %p145, %p146
    %p148 = scmp.ne.s32.totalorder %s139, %s140
    %p149 = scmp.eq.s32.totalorder %s19, 0
    %p150 = por %p148, %p149
    %p151 = scmp.ne.s32.totalorder %s139, %s140
    %p152 = scmp.eq.s32.totalorder %s20, 3
    %p153 = por %p151, %p152
    %p155 = scmp.ne.s32.totalorder %s140, %s154
    %p156 = scmp.eq.s32.totalorder %s20, 0
    %p157 = por %p155, %p156
    %s159 = sadd.s32 %s158, 1
    %p162 = scmp.eq.s32.totalorder %s14, 3
    %p163 = scmp.ne.s32.totalorder %s158, %s160
    %p164 = scmp.eq.s32.totalorder %s14, 0
    %p165 = por %p163, %p164
    %p166 = scmp.ne.s32.totalorder %s158, %s160
    %p167 = scmp.eq.s32.totalorder %s19, 3
    %p168 = por %p166, %p167
    %p169 = scmp.ne.s32.totalorder %s160, %s161
    %p170 = scmp.eq.s32.totalorder %s19, 0
    %p171 = por %p169, %p170
    %p172 = scmp.ne.s32.totalorder %s160, %s161
    %p173 = scmp.eq.s32.totalorder %s20, 3
    %p174 = por %p172, %p173
    %p176 = scmp.ne.s32.totalorder %s161, %s175
    %p177 = scmp.eq.s32.totalorder %s20, 0
    %p178 = por %p176, %p177
    %s180 = sadd.s32 %s179, 1
    %p183 = scmp.eq.s32.totalorder %s14, 3
    %p184 = scmp.ne.s32.totalorder %s179, %s181
    %p185 = scmp.eq.s32.totalorder %s14, 0
    %p186 = por %p184, %p185
    %p187 = scmp.ne.s32.totalorder %s179, %s181
    %p188 = scmp.eq.s32.totalorder %s19, 3
    %p189 = por %p187, %p188
    %p190 = scmp.ne.s32.totalorder %s181, %s182
    %p191 = scmp.eq.s32.totalorder %s19, 0
    %p192 = por %p190, %p191
    %p193 = scmp.ne.s32.totalorder %s181, %s182
    %p194 = scmp.eq.s32.totalorder %s20, 3
    %p195 = por %p193, %p194
    %p197 = scmp.ne.s32.totalorder %s182, %s196
    %p198 = scmp.eq.s32.totalorder %s20, 0
    %p199 = por %p197, %p198
    %s200 = ssub.s32 %s14, %s21
    %p201 = scmp.eq.s32.totalorder %s200, 0
    %s203 = sadd.s32 %s202, 1
    %s204 = scalar_select %p201, %s202, %s203
    %p207 = pneg %p201
    %p208 = scmp.eq.s32.totalorder %s14, 3
    %p209 = por %p207, %p208
    %p210 = scmp.ne.s32.totalorder %s202, %s205
    %p211 = scmp.eq.s32.totalorder %s14, 0
    %p212 = por %p210, %p211
    %p213 = scmp.ne.s32.totalorder %s202, %s205
    %p214 = scmp.eq.s32.totalorder %s19, 3
    %p215 = por %p213, %p214
    %p216 = scmp.ne.s32.totalorder %s205, %s206
    %p217 = scmp.eq.s32.totalorder %s19, 0
    %p218 = por %p216, %p217
    %p219 = scmp.ne.s32.totalorder %s205, %s206
    %p220 = scmp.eq.s32.totalorder %s20, 3
    %p221 = por %p219, %p220
    %p223 = scmp.ne.s32.totalorder %s206, %s222
    %p224 = scmp.eq.s32.totalorder %s20, 0
    %p225 = por %p223, %p224
    %p226 = scmp.le.s32.totalorder 1, %s14
    %p227 = scmp.lt.s32.totalorder %s14, 5
    %p228 = pnand %p226, %p227
    %p229 = pneg %p228
    // Predicated region
    $region9: #{tpu_custom_call.1} parent=5 // pred_check
      _
    $region10: #{tpu_custom_call.1} parent=5 // pred_check_branch
      %231 = sbr.rel (%p228) target = $region12
    $region11: #{tpu_custom_call.1} parent=5 // pred_region
      %s232 = ssub.s32 %s14, 1
      // Predicated region
      $region13: #{tpu_custom_call.1} parent=11 // pred_check
        %p233 = pneg %p87
      $region14: #{tpu_custom_call.1} parent=11 // pred_check_branch
        %235 = sbr.rel (%p233) target = $region16
      $region15: #{tpu_custom_call.1} parent=11 // pred_region
        _
      $region16: #{tpu_custom_call.1} parent=11 // pred_fallthru
        _
      // Predicated region
      $region17: #{tpu_custom_call.1} parent=11 // pred_check
        %p236 = pneg %p108
      $region18: #{tpu_custom_call.1} parent=11 // pred_check_branch
        %238 = sbr.rel (%p236) target = $region20
      $region19: #{tpu_custom_call.1} parent=11 // pred_region
        _
      $region20: #{tpu_custom_call.1} parent=11 // pred_fallthru
        _
      // Predicated region
      $region21: #{tpu_custom_call.1} parent=11 // pred_check
        %p239 = pneg %p129
      $region22: #{tpu_custom_call.1} parent=11 // pred_check_branch
        %241 = sbr.rel (%p239) target = $region24
      $region23: #{tpu_custom_call.1} parent=11 // pred_region
        _
      $region24: #{tpu_custom_call.1} parent=11 // pred_fallthru
        _
      // Predicated region
      $region25: #{tpu_custom_call.1} parent=11 // pred_check
        %p242 = pneg %p150
      $region26: #{tpu_custom_call.1} parent=11 // pred_check_branch
        %244 = sbr.rel (%p242) target = $region28
      $region27: #{tpu_custom_call.1} parent=11 // pred_region
        _
      $region28: #{tpu_custom_call.1} parent=11 // pred_fallthru
        _
      // Predicated region
      $region29: #{tpu_custom_call.1} parent=11 // pred_check
        %p245 = pneg %p171
      $region30: #{tpu_custom_call.1} parent=11 // pred_check_branch
        %247 = sbr.rel (%p245) target = $region32
      $region31: #{tpu_custom_call.1} parent=11 // pred_region
        _
      $region32: #{tpu_custom_call.1} parent=11 // pred_fallthru
        _
      // Predicated region
      $region33: #{tpu_custom_call.1} parent=11 // pred_check
        %p248 = pneg %p192
      $region34: #{tpu_custom_call.1} parent=11 // pred_check_branch
        %250 = sbr.rel (%p248) target = $region36
      $region35: #{tpu_custom_call.1} parent=11 // pred_region
        _
      $region36: #{tpu_custom_call.1} parent=11 // pred_fallthru
        _
    $region12: #{tpu_custom_call.1} parent=5 // pred_fallthru
      _
    %p251 = scmp.lt.s32.totalorder %s14, 4
    // Predicated region
    $region37: #{tpu_custom_call.1} parent=5 // pred_check
      %p252 = pneg %p251
    $region38: #{tpu_custom_call.1} parent=5 // pred_check_branch
      %254 = sbr.rel (%p252) target = $region40
    $region39: #{tpu_custom_call.1} parent=5 // pred_region
      // Predicated region
      $region41: #{tpu_custom_call.1} parent=39 // pred_check
        %p255 = pneg %p34
      $region42: #{tpu_custom_call.1} parent=39 // pred_check_branch
        %257 = sbr.rel (%p255) target = $region44
      $region43: #{tpu_custom_call.1} parent=39 // pred_region
        %s258 = smul.u32 8, %s14
        %p259 = scmp.lt.s32.totalorder %s258, 31
        %s260 = scalar_select %p259, %s258, 31
        %s261 = smul.addr %s260, 8
        %s262 = scalar_lea.vmem %s0, %s261
        %s263 = smul.u32 8, %s14
      $region44: #{tpu_custom_call.1} parent=39 // pred_fallthru
        _
      // Predicated region
      $region45: #{tpu_custom_call.1} parent=39 // pred_check
        %p264 = pneg %p60
      $region46: #{tpu_custom_call.1} parent=39 // pred_check_branch
        %266 = sbr.rel (%p264) target = $region48
      $region47: #{tpu_custom_call.1} parent=39 // pred_region
        %s267 = smul.u32 8, %s14
        %p268 = scmp.lt.s32.totalorder %s267, 31
        %s269 = scalar_select %p268, %s267, 31
        %s270 = smul.addr %s269, 8
        %s271 = scalar_lea.vmem %s1, %s270
        %s272 = smul.u32 8, %s14
      $region48: #{tpu_custom_call.1} parent=39 // pred_fallthru
        _
    $region40: #{tpu_custom_call.1} parent=5 // pred_fallthru
      _
    %p273 = scmp.le.s32.totalorder 1, %s14
    %p274 = scmp.lt.s32.totalorder %s14, 5
    %p275 = pnand %p273, %p274
    %p276 = pneg %p275
    // Predicated region
    $region49: #{tpu_custom_call.1} parent=5 // pred_check
      _
    $region50: #{tpu_custom_call.1} parent=5 // pred_check_branch
      %278 = sbr.rel (%p275) target = $region52
    $region51: #{tpu_custom_call.1} parent=5 // pred_region
      %s279 = ssub.s32 %s14, 1
      %s280 = smul.u32 8, %s19
      %p281 = scmp.lt.s32.totalorder %s280, 31
      %s282 = scalar_select %p281, %s280, 31
      %s283 = smul.addr %s282, 8
      %s284 = scalar_lea.vmem %s0, %s283
      %p285 = pneg %p40
      %p286 = pneg %p37
      %s287 = smul.u32 8, %s19
      %p288 = scmp.lt.s32.totalorder %s287, 31
      %s289 = scalar_select %p288, %s287, 31
      %s290 = smul.addr %s289, 8
      %s291 = scalar_lea.vmem %s1, %s290
      %p292 = pneg %p66
      %p293 = pneg %p63
      %p294 = pneg %p87
      %p295 = pneg %p84
      %p296 = pneg %p108
      %p297 = pneg %p105
      %p298 = pneg %p129
      %p299 = pneg %p126
      %p300 = pneg %p150
      %p301 = pneg %p147
      %p302 = pneg %p171
      %p303 = pneg %p168
      %p304 = pneg %p192
      %p305 = pneg %p189
      %p306 = pneg %p218
      %p307 = pneg %p215
      %p308 = scmp.lt.s32.totalorder %s19, 3
      %s309 = scalar_select %p308, %s19, 3
      %s310 = smul.addr %s309, 8
      %s311 = scalar_lea.vmem %s8, %s310
      %s312 = smul.u32 8, %s19
      %p313 = scmp.lt.s32.totalorder %s312, 31
      %s314 = scalar_select %p313, %s312, 31
      %s315 = smul.addr %s314, 8
      %s316 = scalar_lea.vmem %s0, %s315
      %s317 = smul.u32 8, %s19
      %s318 = smul.u32 8, %s19
      %p319 = scmp.lt.s32.totalorder %s318, 31
      %s320 = scalar_select %p319, %s318, 31
      %s321 = smul.addr %s320, 8
      %s322 = scalar_lea.vmem %s1, %s321
      %s323 = smul.u32 8, %s19
      %p324 = scmp.lt.s32.totalorder %s19, 3
      %s325 = scalar_select %p324, %s19, 3
      %s326 = smul.addr %s325, 8
      %s327 = scalar_lea.vmem %s8, %s326
      %v328 = vld [vmem:[%s316] sm:$0xff]
      %v329 = vld [vmem:[%s316 + $0x8] sm:$0xff]
      %v330 = vld [vmem:[%s316 + $0x10] sm:$0xff]
      %v331 = vld [vmem:[%s316 + $0x18] sm:$0xff]
      %v332 = vld [vmem:[%s316 + $0x20] sm:$0xff]
      %v333 = vld [vmem:[%s316 + $0x28] sm:$0xff]
      %v334 = vld [vmem:[%s316 + $0x30] sm:$0xff]
      %v335 = vld [vmem:[%s316 + $0x38] sm:$0xff]
      %vm336 = vcmask 261120
      %337 = vst.msk [vmem:[#allocation2] sm:$0xff] %vm336, %v328
      %338 = vst.msk [vmem:[#allocation2 + $0x8] sm:$0xff] %vm336, %v329
      %339 = vst.msk [vmem:[#allocation2 + $0x10] sm:$0xff] %vm336, %v330
      %340 = vst.msk [vmem:[#allocation2 + $0x18] sm:$0xff] %vm336, %v331
      %341 = vst.msk [vmem:[#allocation2 + $0x20] sm:$0xff] %vm336, %v332
      %342 = vst.msk [vmem:[#allocation2 + $0x28] sm:$0xff] %vm336, %v333
      %343 = vst.msk [vmem:[#allocation2 + $0x30] sm:$0xff] %vm336, %v334
      %344 = vst.msk [vmem:[#allocation2 + $0x38] sm:$0xff] %vm336, %v335
      %v345 = vld [vmem:[%s322] sm:$0xff]
      %v346 = vld [vmem:[%s322 + $0x8] sm:$0xff]
      %v347 = vld [vmem:[%s322 + $0x10] sm:$0xff]
      %v348 = vld [vmem:[%s322 + $0x18] sm:$0xff]
      %v349 = vld [vmem:[%s322 + $0x20] sm:$0xff]
      %v350 = vld [vmem:[%s322 + $0x28] sm:$0xff]
      %v351 = vld [vmem:[%s322 + $0x30] sm:$0xff]
      %v352 = vld [vmem:[%s322 + $0x38] sm:$0xff]
      %353 = vst.msk [vmem:[#allocation2 + $0x40] sm:$0xff] %vm336, %v345
      %354 = vst.msk [vmem:[#allocation2 + $0x48] sm:$0xff] %vm336, %v346
      %355 = vst.msk [vmem:[#allocation2 + $0x50] sm:$0xff] %vm336, %v347
      %356 = vst.msk [vmem:[#allocation2 + $0x58] sm:$0xff] %vm336, %v348
      %357 = vst.msk [vmem:[#allocation2 + $0x60] sm:$0xff] %vm336, %v349
      %358 = vst.msk [vmem:[#allocation2 + $0x68] sm:$0xff] %vm336, %v350
      %359 = vst.msk [vmem:[#allocation2 + $0x70] sm:$0xff] %vm336, %v351
      %360 = vst.msk [vmem:[#allocation2 + $0x78] sm:$0xff] %vm336, %v352
      %v361 = vld [vmem:[#allocation2] sm:$0xff]
      %v362 = vld [vmem:[#allocation2 + $0x8] sm:$0xff]
      %v363 = vld [vmem:[#allocation2 + $0x10] sm:$0xff]
      %v364 = vld [vmem:[#allocation2 + $0x18] sm:$0xff]
      %v365 = vld [vmem:[#allocation2 + $0x20] sm:$0xff]
      %v366 = vld [vmem:[#allocation2 + $0x28] sm:$0xff]
      %v367 = vld [vmem:[#allocation2 + $0x30] sm:$0xff]
      %v368 = vld [vmem:[#allocation2 + $0x38] sm:$0xff]
      %v369 = vld [vmem:[#allocation2 + $0x40] sm:$0xff]
      %v370 = vld [vmem:[#allocation2 + $0x48] sm:$0xff]
      %v371 = vld [vmem:[#allocation2 + $0x50] sm:$0xff]
      %v372 = vld [vmem:[#allocation2 + $0x58] sm:$0xff]
      %v373 = vld [vmem:[#allocation2 + $0x60] sm:$0xff]
      %v374 = vld [vmem:[#allocation2 + $0x68] sm:$0xff]
      %v375 = vld [vmem:[#allocation2 + $0x70] sm:$0xff]
      %v376 = vld [vmem:[#allocation2 + $0x78] sm:$0xff]
      %v377 = vld [vmem:[%s2] sm:$0xff]
      %v378 = vld [vmem:[%s2 + $0x8] sm:$0xff]
      %v379 = vld [vmem:[%s2 + $0x10] sm:$0xff]
      %v380 = vld [vmem:[%s2 + $0x18] sm:$0xff]
      %v381 = vld [vmem:[%s3] sm:$0x1]
      %v383 = vlaneseq
      %v384 = vshrl.u32 %v383, 7
      %v385 = vsub.s32 0, %v384
      %v386 = vrot.slane %v381, %v385
      %v389 = vsel %vm336, %v361, 0
      %v392 = vsel %vm336, %v362, 0
      %v395 = vsel %vm336, %v363, 0
      %v398 = vsel %vm336, %v364, 0
      %v401 = vsel %vm336, %v365, 0
      %v404 = vsel %vm336, %v366, 0
      %v407 = vsel %vm336, %v367, 0
      %v410 = vsel %vm336, %v368, 0
      %v413 = vsel %vm336, %v369, 0
      %v416 = vsel %vm336, %v370, 0
      %v419 = vsel %vm336, %v371, 0
      %v422 = vsel %vm336, %v372, 0
      %v425 = vsel %vm336, %v373, 0
      %v428 = vsel %vm336, %v374, 0
      %v431 = vsel %vm336, %v375, 0
      %v434 = vsel %vm336, %v376, 0
      %436 = vmatprep.subr.mxu0 0.0
      %437 = vmatpush1.msra.mxu0 0.0
      %438 = vmatprep.subr.mxu0 0.0
      %439 = vmatpush1.msra.mxu0 0.0
      %440 = vmatprep.subr.mxu0 0.0
      %441 = vmatpush1.msra.mxu0 0.0
      %442 = vmatprep.subr.mxu0 0.0
      %443 = vmatpush1.msra.mxu0 0.0
      %444 = vmatprep.subr.mxu0 0.0
      %445 = vmatpush1.msra.mxu0 0.0
      %446 = vmatprep.subr.mxu0 0.0
      %447 = vmatpush1.msra.mxu0 0.0
      %448 = vmatprep.subr.mxu0 0.0
      %449 = vmatpush1.msra.mxu0 0.0
      %450 = vmatprep.subr.mxu0 0.0
      %451 = vmatpush1.msra.mxu0 0.0
      %452 = vmatprep.subr.mxu0 0.0
      %453 = vmatpush1.msra.mxu0 0.0
      %454 = vmatprep.subr.mxu0 0.0
      %455 = vmatpush1.msra.mxu0 0.0
      %456 = vmatprep.subr.mxu0 0.0
      %457 = vmatpush1.msra.mxu0 0.0
      %458 = vmatprep.subr.mxu0 0.0
      %459 = vmatpush1.msra.mxu0 0.0
      %460 = vmatprep.subr.mxu0 0.0
      %461 = vmatpush1.msra.mxu0 %v380
      %462 = vmatprep.subr.mxu0 0.0
      %463 = vmatpush1.msra.mxu0 %v379
      %464 = vmatprep.subr.mxu0 0.0
      %465 = vmatpush1.msra.mxu0 %v378
      %466 = vmatprep.subr.mxu0 0.0
      %467 = vmatpush1.msra.mxu0 %v377
      %468 = vmatprep.subr.mxu0 0.0
      %469 = vmatpush2.msra.mxu0 0.0
      %470 = vmatprep.subr.mxu0 0.0
      %471 = vmatpush2.msra.mxu0 0.0
      %472 = vmatprep.subr.mxu0 0.0
      %473 = vmatpush2.msra.mxu0 0.0
      %474 = vmatprep.subr.mxu0 0.0
      %475 = vmatpush2.msra.mxu0 0.0
      %476 = vmatprep.subr.mxu0 0.0
      %477 = vmatpush2.msra.mxu0 0.0
      %478 = vmatprep.subr.mxu0 0.0
      %479 = vmatpush2.msra.mxu0 0.0
      %480 = vmatprep.subr.mxu0 0.0
      %481 = vmatpush2.msra.mxu0 0.0
      %482 = vmatprep.subr.mxu0 0.0
      %483 = vmatpush2.msra.mxu0 0.0
      %484 = vmatprep.subr.mxu0 0.0
      %485 = vmatpush2.msra.mxu0 0.0
      %486 = vmatprep.subr.mxu0 0.0
      %487 = vmatpush2.msra.mxu0 0.0
      %488 = vmatprep.subr.mxu0 0.0
      %489 = vmatpush2.msra.mxu0 0.0
      %490 = vmatprep.subr.mxu0 0.0
      %491 = vmatpush2.msra.mxu0 0.0
      %492 = vmatprep.subr.mxu0 0.0
      %493 = vmatpush2.msra.mxu0 0.0
      %494 = vmatprep.subr.mxu0 0.0
      %495 = vmatpush2.msra.mxu0 0.0
      %496 = vmatprep.subr.mxu0 0.0
      %497 = vmatpush2.msra.mxu0 0.0
      %498 = vmatprep.subr.mxu0 0.0
      %499 = vmatpush2.msra.mxu0 0.0
      %500 = vmatprep.mubr.f32.mxu0 0.0
      %501 = vmatmul.mubr.f32.gmra.mxu0 %v389
      %v502 = vpop.f32.mrf.mxu0
      %v503 = vadd.f32 %v386, %v502
      %v504 = vpop.f32.mrf.mxu0
      %505 = vmatprep.mubr.f32.mxu0 0.0
      %506 = vmatmul.mubr.f32.gmra.mxu0 %v392
      %v507 = vpop.f32.mrf.mxu0
      %v508 = vadd.f32 %v386, %v507
      %v509 = vpop.f32.mrf.mxu0
      %510 = vmatprep.mubr.f32.mxu0 0.0
      %511 = vmatmul.mubr.f32.gmra.mxu0 %v395
      %v512 = vpop.f32.mrf.mxu0
      %v513 = vadd.f32 %v386, %v512
      %v514 = vpop.f32.mrf.mxu0
      %515 = vmatprep.mubr.f32.mxu0 0.0
      %516 = vmatmul.mubr.f32.gmra.mxu0 %v398
      %v517 = vpop.f32.mrf.mxu0
      %v518 = vadd.f32 %v386, %v517
      %v519 = vpop.f32.mrf.mxu0
      %520 = vmatprep.mubr.f32.mxu0 0.0
      %521 = vmatmul.mubr.f32.gmra.mxu0 %v401
      %v522 = vpop.f32.mrf.mxu0
      %v523 = vadd.f32 %v386, %v522
      %v524 = vpop.f32.mrf.mxu0
      %525 = vmatprep.mubr.f32.mxu0 0.0
      %526 = vmatmul.mubr.f32.gmra.mxu0 %v404
      %v527 = vpop.f32.mrf.mxu0
      %v528 = vadd.f32 %v386, %v527
      %v529 = vpop.f32.mrf.mxu0
      %530 = vmatprep.mubr.f32.mxu0 0.0
      %531 = vmatmul.mubr.f32.gmra.mxu0 %v407
      %v532 = vpop.f32.mrf.mxu0
      %v533 = vadd.f32 %v386, %v532
      %v534 = vpop.f32.mrf.mxu0
      %535 = vmatprep.mubr.f32.mxu0 0.0
      %536 = vmatmul.mubr.f32.gmra.mxu0 %v410
      %v537 = vpop.f32.mrf.mxu0
      %v538 = vadd.f32 %v386, %v537
      %v539 = vpop.f32.mrf.mxu0
      %540 = vmatprep.mubr.f32.mxu0 0.0
      %541 = vmatmul.mubr.f32.gmra.mxu0 %v413
      %v542 = vpop.f32.mrf.mxu0
      %v543 = vadd.f32 %v386, %v542
      %v544 = vpop.f32.mrf.mxu0
      %545 = vmatprep.mubr.f32.mxu0 0.0
      %546 = vmatmul.mubr.f32.gmra.mxu0 %v416
      %v547 = vpop.f32.mrf.mxu0
      %v548 = vadd.f32 %v386, %v547
      %v549 = vpop.f32.mrf.mxu0
      %550 = vmatprep.mubr.f32.mxu0 0.0
      %551 = vmatmul.mubr.f32.gmra.mxu0 %v419
      %v552 = vpop.f32.mrf.mxu0
      %v553 = vadd.f32 %v386, %v552
      %v554 = vpop.f32.mrf.mxu0
      %555 = vmatprep.mubr.f32.mxu0 0.0
      %556 = vmatmul.mubr.f32.gmra.mxu0 %v422
      %v557 = vpop.f32.mrf.mxu0
      %v558 = vadd.f32 %v386, %v557
      %v559 = vpop.f32.mrf.mxu0
      %560 = vmatprep.mubr.f32.mxu0 0.0
      %561 = vmatmul.mubr.f32.gmra.mxu0 %v425
      %v562 = vpop.f32.mrf.mxu0
      %v563 = vadd.f32 %v386, %v562
      %v564 = vpop.f32.mrf.mxu0
      %565 = vmatprep.mubr.f32.mxu0 0.0
      %566 = vmatmul.mubr.f32.gmra.mxu0 %v428
      %v567 = vpop.f32.mrf.mxu0
      %v568 = vadd.f32 %v386, %v567
      %v569 = vpop.f32.mrf.mxu0
      %570 = vmatprep.mubr.f32.mxu0 0.0
      %571 = vmatmul.mubr.f32.gmra.mxu0 %v431
      %v572 = vpop.f32.mrf.mxu0
      %v573 = vadd.f32 %v386, %v572
      %v574 = vpop.f32.mrf.mxu0
      %575 = vmatprep.mubr.f32.mxu0 0.0
      %576 = vmatmul.mubr.f32.gmra.mxu0 %v434
      %v577 = vpop.f32.mrf.mxu0
      %v578 = vadd.f32 %v386, %v577
      %v579 = vpop.f32.mrf.mxu0
      %580 = vdwg.mxu0
      %v581 = vmax.f32 %v503, 0.0
      %v582 = vmax.f32 %v508, 0.0
      %v583 = vmax.f32 %v513, 0.0
      %v584 = vmax.f32 %v518, 0.0
      %v585 = vmax.f32 %v523, 0.0
      %v586 = vmax.f32 %v528, 0.0
      %v587 = vmax.f32 %v533, 0.0
      %v588 = vmax.f32 %v538, 0.0
      %v589 = vmax.f32 %v543, 0.0
      %v590 = vmax.f32 %v548, 0.0
      %v591 = vmax.f32 %v553, 0.0
      %v592 = vmax.f32 %v558, 0.0
      %v593 = vmax.f32 %v563, 0.0
      %v594 = vmax.f32 %v568, 0.0
      %v595 = vmax.f32 %v573, 0.0
      %v596 = vmax.f32 %v578, 0.0
      %v597 = vld [vmem:[%s4] sm:$0xff]
      %v598 = vld [vmem:[%s4 + $0x8] sm:$0xff]
      %v599 = vld [vmem:[%s4 + $0x10] sm:$0xff]
      %v600 = vld [vmem:[%s4 + $0x18] sm:$0xff]
      %v601 = vld [vmem:[%s4 + $0x20] sm:$0xff]
      %v602 = vld [vmem:[%s4 + $0x28] sm:$0xff]
      %v603 = vld [vmem:[%s4 + $0x30] sm:$0xff]
      %v604 = vld [vmem:[%s4 + $0x38] sm:$0xff]
      %v605 = vld [vmem:[%s5] sm:$0x1]
      %v607 = vlaneseq
      %v608 = vshrl.u32 %v607, 7
      %v609 = vsub.s32 0, %v608
      %v610 = vrot.slane %v605, %v609
      %vm612 = vcmask 523264
      %v614 = vsel %vm612, %v581, 0
      %v617 = vsel %vm612, %v582, 0
      %v620 = vsel %vm612, %v583, 0
      %v623 = vsel %vm612, %v584, 0
      %v626 = vsel %vm612, %v585, 0
      %v629 = vsel %vm612, %v586, 0
      %v632 = vsel %vm612, %v587, 0
      %v635 = vsel %vm612, %v588, 0
      %v638 = vsel %vm612, %v589, 0
      %v641 = vsel %vm612, %v590, 0
      %v644 = vsel %vm612, %v591, 0
      %v647 = vsel %vm612, %v592, 0
      %v650 = vsel %vm612, %v593, 0
      %v653 = vsel %vm612, %v594, 0
      %v656 = vsel %vm612, %v595, 0
      %v659 = vsel %vm612, %v596, 0
      %661 = vmatprep.subr.mxu0 0.0
      %662 = vmatpush1.msra.mxu0 0.0
      %663 = vmatprep.subr.mxu0 0.0
      %664 = vmatpush1.msra.mxu0 0.0
      %665 = vmatprep.subr.mxu0 0.0
      %666 = vmatpush1.msra.mxu0 0.0
      %667 = vmatprep.subr.mxu0 0.0
      %668 = vmatpush1.msra.mxu0 0.0
      %669 = vmatprep.subr.mxu0 0.0
      %670 = vmatpush1.msra.mxu0 0.0
      %671 = vmatprep.subr.mxu0 0.0
      %672 = vmatpush1.msra.mxu0 0.0
      %673 = vmatprep.subr.mxu0 0.0
      %674 = vmatpush1.msra.mxu0 0.0
      %675 = vmatprep.subr.mxu0 0.0
      %676 = vmatpush1.msra.mxu0 0.0
      %677 = vmatprep.subr.mxu0 0.0
      %678 = vmatpush1.msra.mxu0 %v604
      %679 = vmatprep.subr.mxu0 0.0
      %680 = vmatpush1.msra.mxu0 %v603
      %681 = vmatprep.subr.mxu0 0.0
      %682 = vmatpush1.msra.mxu0 %v602
      %683 = vmatprep.subr.mxu0 0.0
      %684 = vmatpush1.msra.mxu0 %v601
      %685 = vmatprep.subr.mxu0 0.0
      %686 = vmatpush1.msra.mxu0 %v600
      %687 = vmatprep.subr.mxu0 0.0
      %688 = vmatpush1.msra.mxu0 %v599
      %689 = vmatprep.subr.mxu0 0.0
      %690 = vmatpush1.msra.mxu0 %v598
      %691 = vmatprep.subr.mxu0 0.0
      %692 = vmatpush1.msra.mxu0 %v597
      %693 = vmatprep.subr.mxu0 0.0
      %694 = vmatpush2.msra.mxu0 0.0
      %695 = vmatprep.subr.mxu0 0.0
      %696 = vmatpush2.msra.mxu0 0.0
      %697 = vmatprep.subr.mxu0 0.0
      %698 = vmatpush2.msra.mxu0 0.0
      %699 = vmatprep.subr.mxu0 0.0
      %700 = vmatpush2.msra.mxu0 0.0
      %701 = vmatprep.subr.mxu0 0.0
      %702 = vmatpush2.msra.mxu0 0.0
      %703 = vmatprep.subr.mxu0 0.0
      %704 = vmatpush2.msra.mxu0 0.0
      %705 = vmatprep.subr.mxu0 0.0
      %706 = vmatpush2.msra.mxu0 0.0
      %707 = vmatprep.subr.mxu0 0.0
      %708 = vmatpush2.msra.mxu0 0.0
      %709 = vmatprep.subr.mxu0 0.0
      %710 = vmatpush2.msra.mxu0 0.0
      %711 = vmatprep.subr.mxu0 0.0
      %712 = vmatpush2.msra.mxu0 0.0
      %713 = vmatprep.subr.mxu0 0.0
      %714 = vmatpush2.msra.mxu0 0.0
      %715 = vmatprep.subr.mxu0 0.0
      %716 = vmatpush2.msra.mxu0 0.0
      %717 = vmatprep.subr.mxu0 0.0
      %718 = vmatpush2.msra.mxu0 0.0
      %719 = vmatprep.subr.mxu0 0.0
      %720 = vmatpush2.msra.mxu0 0.0
      %721 = vmatprep.subr.mxu0 0.0
      %722 = vmatpush2.msra.mxu0 0.0
      %723 = vmatprep.subr.mxu0 0.0
      %724 = vmatpush2.msra.mxu0 0.0
      %725 = vmatprep.mubr.f32.mxu0 0.0
      %726 = vmatmul.mubr.f32.gmra.mxu0 %v614
      %v727 = vpop.f32.mrf.mxu0
      %v728 = vadd.f32 %v610, %v727
      %v729 = vpop.f32.mrf.mxu0
      %730 = vmatprep.mubr.f32.mxu0 0.0
      %731 = vmatmul.mubr.f32.gmra.mxu0 %v617
      %v732 = vpop.f32.mrf.mxu0
      %v733 = vadd.f32 %v610, %v732
      %v734 = vpop.f32.mrf.mxu0
      %735 = vmatprep.mubr.f32.mxu0 0.0
      %736 = vmatmul.mubr.f32.gmra.mxu0 %v620
      %v737 = vpop.f32.mrf.mxu0
      %v738 = vadd.f32 %v610, %v737
      %v739 = vpop.f32.mrf.mxu0
      %740 = vmatprep.mubr.f32.mxu0 0.0
      %741 = vmatmul.mubr.f32.gmra.mxu0 %v623
      %v742 = vpop.f32.mrf.mxu0
      %v743 = vadd.f32 %v610, %v742
      %v744 = vpop.f32.mrf.mxu0
      %745 = vmatprep.mubr.f32.mxu0 0.0
      %746 = vmatmul.mubr.f32.gmra.mxu0 %v626
      %v747 = vpop.f32.mrf.mxu0
      %v748 = vadd.f32 %v610, %v747
      %v749 = vpop.f32.mrf.mxu0
      %750 = vmatprep.mubr.f32.mxu0 0.0
      %751 = vmatmul.mubr.f32.gmra.mxu0 %v629
      %v752 = vpop.f32.mrf.mxu0
      %v753 = vadd.f32 %v610, %v752
      %v754 = vpop.f32.mrf.mxu0
      %755 = vmatprep.mubr.f32.mxu0 0.0
      %756 = vmatmul.mubr.f32.gmra.mxu0 %v632
      %v757 = vpop.f32.mrf.mxu0
      %v758 = vadd.f32 %v610, %v757
      %v759 = vpop.f32.mrf.mxu0
      %760 = vmatprep.mubr.f32.mxu0 0.0
      %761 = vmatmul.mubr.f32.gmra.mxu0 %v635
      %v762 = vpop.f32.mrf.mxu0
      %v763 = vadd.f32 %v610, %v762
      %v764 = vpop.f32.mrf.mxu0
      %765 = vmatprep.mubr.f32.mxu0 0.0
      %766 = vmatmul.mubr.f32.gmra.mxu0 %v638
      %v767 = vpop.f32.mrf.mxu0
      %v768 = vadd.f32 %v610, %v767
      %v769 = vpop.f32.mrf.mxu0
      %770 = vmatprep.mubr.f32.mxu0 0.0
      %771 = vmatmul.mubr.f32.gmra.mxu0 %v641
      %v772 = vpop.f32.mrf.mxu0
      %v773 = vadd.f32 %v610, %v772
      %v774 = vpop.f32.mrf.mxu0
      %775 = vmatprep.mubr.f32.mxu0 0.0
      %776 = vmatmul.mubr.f32.gmra.mxu0 %v644
      %v777 = vpop.f32.mrf.mxu0
      %v778 = vadd.f32 %v610, %v777
      %v779 = vpop.f32.mrf.mxu0
      %780 = vmatprep.mubr.f32.mxu0 0.0
      %781 = vmatmul.mubr.f32.gmra.mxu0 %v647
      %v782 = vpop.f32.mrf.mxu0
      %v783 = vadd.f32 %v610, %v782
      %v784 = vpop.f32.mrf.mxu0
      %785 = vmatprep.mubr.f32.mxu0 0.0
      %786 = vmatmul.mubr.f32.gmra.mxu0 %v650
      %v787 = vpop.f32.mrf.mxu0
      %v788 = vadd.f32 %v610, %v787
      %v789 = vpop.f32.mrf.mxu0
      %790 = vmatprep.mubr.f32.mxu0 0.0
      %791 = vmatmul.mubr.f32.gmra.mxu0 %v653
      %v792 = vpop.f32.mrf.mxu0
      %v793 = vadd.f32 %v610, %v792
      %v794 = vpop.f32.mrf.mxu0
      %795 = vmatprep.mubr.f32.mxu0 0.0
      %796 = vmatmul.mubr.f32.gmra.mxu0 %v656
      %v797 = vpop.f32.mrf.mxu0
      %v798 = vadd.f32 %v610, %v797
      %v799 = vpop.f32.mrf.mxu0
      %800 = vmatprep.mubr.f32.mxu0 0.0
      %801 = vmatmul.mubr.f32.gmra.mxu0 %v659
      %v802 = vpop.f32.mrf.mxu0
      %v803 = vadd.f32 %v610, %v802
      %v804 = vpop.f32.mrf.mxu0
      %805 = vdwg.mxu0
      %v806 = vmax.f32 %v728, 0.0
      %v807 = vmax.f32 %v733, 0.0
      %v808 = vmax.f32 %v738, 0.0
      %v809 = vmax.f32 %v743, 0.0
      %v810 = vmax.f32 %v748, 0.0
      %v811 = vmax.f32 %v753, 0.0
      %v812 = vmax.f32 %v758, 0.0
      %v813 = vmax.f32 %v763, 0.0
      %v814 = vmax.f32 %v768, 0.0
      %v815 = vmax.f32 %v773, 0.0
      %v816 = vmax.f32 %v778, 0.0
      %v817 = vmax.f32 %v783, 0.0
      %v818 = vmax.f32 %v788, 0.0
      %v819 = vmax.f32 %v793, 0.0
      %v820 = vmax.f32 %v798, 0.0
      %v821 = vmax.f32 %v803, 0.0
      %v822 = vld [vmem:[%s6] sm:$0xff]
      %v823 = vld [vmem:[%s6 + $0x8] sm:$0xff]
      %v824 = vld [vmem:[%s6 + $0x10] sm:$0xff]
      %v825 = vld [vmem:[%s6 + $0x18] sm:$0xff]
      %v826 = vld [vmem:[%s6 + $0x20] sm:$0xff]
      %v827 = vld [vmem:[%s6 + $0x28] sm:$0xff]
      %v828 = vld [vmem:[%s6 + $0x30] sm:$0xff]
      %v829 = vld [vmem:[%s6 + $0x38] sm:$0xff]
      %v830 = vld [vmem:[%s7] sm:$0x1]
      %v832 = vlaneseq
      %v833 = vshrl.u32 %v832, 7
      %v834 = vsub.s32 0, %v833
      %v835 = vrot.slane %v830, %v834
      %v838 = vsel %vm612, %v806, 0
      %v841 = vsel %vm612, %v807, 0
      %v844 = vsel %vm612, %v808, 0
      %v847 = vsel %vm612, %v809, 0
      %v850 = vsel %vm612, %v810, 0
      %v853 = vsel %vm612, %v811, 0
      %v856 = vsel %vm612, %v812, 0
      %v859 = vsel %vm612, %v813, 0
      %v862 = vsel %vm612, %v814, 0
      %v865 = vsel %vm612, %v815, 0
      %v868 = vsel %vm612, %v816, 0
      %v871 = vsel %vm612, %v817, 0
      %v874 = vsel %vm612, %v818, 0
      %v877 = vsel %vm612, %v819, 0
      %v880 = vsel %vm612, %v820, 0
      %v883 = vsel %vm612, %v821, 0
      %885 = vmatprep.subr.mxu0 0.0
      %886 = vmatpush1.msra.mxu0 0.0
      %887 = vmatprep.subr.mxu0 0.0
      %888 = vmatpush1.msra.mxu0 0.0
      %889 = vmatprep.subr.mxu0 0.0
      %890 = vmatpush1.msra.mxu0 0.0
      %891 = vmatprep.subr.mxu0 0.0
      %892 = vmatpush1.msra.mxu0 0.0
      %893 = vmatprep.subr.mxu0 0.0
      %894 = vmatpush1.msra.mxu0 0.0
      %895 = vmatprep.subr.mxu0 0.0
      %896 = vmatpush1.msra.mxu0 0.0
      %897 = vmatprep.subr.mxu0 0.0
      %898 = vmatpush1.msra.mxu0 0.0
      %899 = vmatprep.subr.mxu0 0.0
      %900 = vmatpush1.msra.mxu0 0.0
      %901 = vmatprep.subr.mxu0 0.0
      %902 = vmatpush1.msra.mxu0 %v829
      %903 = vmatprep.subr.mxu0 0.0
      %904 = vmatpush1.msra.mxu0 %v828
      %905 = vmatprep.subr.mxu0 0.0
      %906 = vmatpush1.msra.mxu0 %v827
      %907 = vmatprep.subr.mxu0 0.0
      %908 = vmatpush1.msra.mxu0 %v826
      %909 = vmatprep.subr.mxu0 0.0
      %910 = vmatpush1.msra.mxu0 %v825
      %911 = vmatprep.subr.mxu0 0.0
      %912 = vmatpush1.msra.mxu0 %v824
      %913 = vmatprep.subr.mxu0 0.0
      %914 = vmatpush1.msra.mxu0 %v823
      %915 = vmatprep.subr.mxu0 0.0
      %916 = vmatpush1.msra.mxu0 %v822
      %917 = vmatprep.subr.mxu0 0.0
      %918 = vmatpush2.msra.mxu0 0.0
      %919 = vmatprep.subr.mxu0 0.0
      %920 = vmatpush2.msra.mxu0 0.0
      %921 = vmatprep.subr.mxu0 0.0
      %922 = vmatpush2.msra.mxu0 0.0
      %923 = vmatprep.subr.mxu0 0.0
      %924 = vmatpush2.msra.mxu0 0.0
      %925 = vmatprep.subr.mxu0 0.0
      %926 = vmatpush2.msra.mxu0 0.0
      %927 = vmatprep.subr.mxu0 0.0
      %928 = vmatpush2.msra.mxu0 0.0
      %929 = vmatprep.subr.mxu0 0.0
      %930 = vmatpush2.msra.mxu0 0.0
      %931 = vmatprep.subr.mxu0 0.0
      %932 = vmatpush2.msra.mxu0 0.0
      %933 = vmatprep.subr.mxu0 0.0
      %934 = vmatpush2.msra.mxu0 0.0
      %935 = vmatprep.subr.mxu0 0.0
      %936 = vmatpush2.msra.mxu0 0.0
      %937 = vmatprep.subr.mxu0 0.0
      %938 = vmatpush2.msra.mxu0 0.0
      %939 = vmatprep.subr.mxu0 0.0
      %940 = vmatpush2.msra.mxu0 0.0
      %941 = vmatprep.subr.mxu0 0.0
      %942 = vmatpush2.msra.mxu0 0.0
      %943 = vmatprep.subr.mxu0 0.0
      %944 = vmatpush2.msra.mxu0 0.0
      %945 = vmatprep.subr.mxu0 0.0
      %946 = vmatpush2.msra.mxu0 0.0
      %947 = vmatprep.subr.mxu0 0.0
      %948 = vmatpush2.msra.mxu0 0.0
      %949 = vmatprep.mubr.f32.mxu0 0.0
      %950 = vmatmul.mubr.f32.gmra.mxu0 %v838
      %v951 = vpop.f32.mrf.mxu0
      %v952 = vadd.f32 %v835, %v951
      %v953 = vpop.f32.mrf.mxu0
      %954 = vmatprep.mubr.f32.mxu0 0.0
      %955 = vmatmul.mubr.f32.gmra.mxu0 %v841
      %v956 = vpop.f32.mrf.mxu0
      %v957 = vadd.f32 %v835, %v956
      %v958 = vpop.f32.mrf.mxu0
      %959 = vmatprep.mubr.f32.mxu0 0.0
      %960 = vmatmul.mubr.f32.gmra.mxu0 %v844
      %v961 = vpop.f32.mrf.mxu0
      %v962 = vadd.f32 %v835, %v961
      %v963 = vpop.f32.mrf.mxu0
      %964 = vmatprep.mubr.f32.mxu0 0.0
      %965 = vmatmul.mubr.f32.gmra.mxu0 %v847
      %v966 = vpop.f32.mrf.mxu0
      %v967 = vadd.f32 %v835, %v966
      %v968 = vpop.f32.mrf.mxu0
      %969 = vmatprep.mubr.f32.mxu0 0.0
      %970 = vmatmul.mubr.f32.gmra.mxu0 %v850
      %v971 = vpop.f32.mrf.mxu0
      %v972 = vadd.f32 %v835, %v971
      %v973 = vpop.f32.mrf.mxu0
      %974 = vmatprep.mubr.f32.mxu0 0.0
      %975 = vmatmul.mubr.f32.gmra.mxu0 %v853
      %v976 = vpop.f32.mrf.mxu0
      %v977 = vadd.f32 %v835, %v976
      %v978 = vpop.f32.mrf.mxu0
      %979 = vmatprep.mubr.f32.mxu0 0.0
      %980 = vmatmul.mubr.f32.gmra.mxu0 %v856
      %v981 = vpop.f32.mrf.mxu0
      %v982 = vadd.f32 %v835, %v981
      %v983 = vpop.f32.mrf.mxu0
      %984 = vmatprep.mubr.f32.mxu0 0.0
      %985 = vmatmul.mubr.f32.gmra.mxu0 %v859
      %v986 = vpop.f32.mrf.mxu0
      %v987 = vadd.f32 %v835, %v986
      %v988 = vpop.f32.mrf.mxu0
      %989 = vmatprep.mubr.f32.mxu0 0.0
      %990 = vmatmul.mubr.f32.gmra.mxu0 %v862
      %v991 = vpop.f32.mrf.mxu0
      %v992 = vadd.f32 %v835, %v991
      %v993 = vpop.f32.mrf.mxu0
      %994 = vmatprep.mubr.f32.mxu0 0.0
      %995 = vmatmul.mubr.f32.gmra.mxu0 %v865
      %v996 = vpop.f32.mrf.mxu0
      %v997 = vadd.f32 %v835, %v996
      %v998 = vpop.f32.mrf.mxu0
      %999 = vmatprep.mubr.f32.mxu0 0.0
      %1000 = vmatmul.mubr.f32.gmra.mxu0 %v868
      %v1001 = vpop.f32.mrf.mxu0
      %v1002 = vadd.f32 %v835, %v1001
      %v1003 = vpop.f32.mrf.mxu0
      %1004 = vmatprep.mubr.f32.mxu0 0.0
      %1005 = vmatmul.mubr.f32.gmra.mxu0 %v871
      %v1006 = vpop.f32.mrf.mxu0
      %v1007 = vadd.f32 %v835, %v1006
      %v1008 = vpop.f32.mrf.mxu0
      %1009 = vmatprep.mubr.f32.mxu0 0.0
      %1010 = vmatmul.mubr.f32.gmra.mxu0 %v874
      %v1011 = vpop.f32.mrf.mxu0
      %v1012 = vadd.f32 %v835, %v1011
      %v1013 = vpop.f32.mrf.mxu0
      %1014 = vmatprep.mubr.f32.mxu0 0.0
      %1015 = vmatmul.mubr.f32.gmra.mxu0 %v877
      %v1016 = vpop.f32.mrf.mxu0
      %v1017 = vadd.f32 %v835, %v1016
      %v1018 = vpop.f32.mrf.mxu0
      %1019 = vmatprep.mubr.f32.mxu0 0.0
      %1020 = vmatmul.mubr.f32.gmra.mxu0 %v880
      %v1021 = vpop.f32.mrf.mxu0
      %v1022 = vadd.f32 %v835, %v1021
      %v1023 = vpop.f32.mrf.mxu0
      %1024 = vmatprep.mubr.f32.mxu0 0.0
      %1025 = vmatmul.mubr.f32.gmra.mxu0 %v883
      %v1026 = vpop.f32.mrf.mxu0
      %v1027 = vadd.f32 %v835, %v1026
      %v1028 = vpop.f32.mrf.mxu0
      %1029 = vdwg.mxu0
      %v1030 = vmul.f32 %v952, %v992
      %v1031 = vmul.f32 %v957, %v997
      %v1032 = vmul.f32 %v962, %v1002
      %v1033 = vmul.f32 %v967, %v1007
      %v1034 = vmul.f32 %v972, %v1012
      %v1035 = vmul.f32 %v977, %v1017
      %v1036 = vmul.f32 %v982, %v1022
      %v1037 = vmul.f32 %v987, %v1027
      %vm1038 = vcmask 130048
      %v1039 = vsel %vm1038, %v1030, 0.0
      %1040 = vadd.xlane.f32.xlu0 %v1039
      %v1041 = vpop.xlane.xlu0 %1040
      %v1042 = vsel %vm1038, %v1031, 0.0
      %1043 = vadd.xlane.f32.xlu0 %v1042
      %v1044 = vpop.xlane.xlu0 %1043
      %v1045 = vsel %vm1038, %v1032, 0.0
      %1046 = vadd.xlane.f32.xlu0 %v1045
      %v1047 = vpop.xlane.xlu0 %1046
      %v1048 = vsel %vm1038, %v1033, 0.0
      %1049 = vadd.xlane.f32.xlu0 %v1048
      %v1050 = vpop.xlane.xlu0 %1049
      %v1051 = vsel %vm1038, %v1034, 0.0
      %1052 = vadd.xlane.f32.xlu0 %v1051
      %v1053 = vpop.xlane.xlu0 %1052
      %v1054 = vsel %vm1038, %v1035, 0.0
      %1055 = vadd.xlane.f32.xlu0 %v1054
      %v1056 = vpop.xlane.xlu0 %1055
      %v1057 = vsel %vm1038, %v1036, 0.0
      %1058 = vadd.xlane.f32.xlu0 %v1057
      %v1059 = vpop.xlane.xlu0 %1058
      %v1060 = vsel %vm1038, %v1037, 0.0
      %1061 = vadd.xlane.f32.xlu0 %v1060
      %v1062 = vpop.xlane.xlu0 %1061
      %v1071 = vlaneseq
      %v1072 = vand.u32 %v1071, 127
      %v1073 = vlaneseq
      %v1074 = vshrl.u32 %v1073, 7
      %v1075 = vsub.s32 %v1072, %v1074
      %v1076 = vrot.slane %v1041, %v1075
      %v1077 = vlaneseq
      %v1078 = vshrl.u32 %v1077, 7
      %v1079 = vsub.s32 %v1072, %v1078
      %v1080 = vrot.slane %v1044, %v1079
      %v1081 = vlaneseq
      %v1082 = vshrl.u32 %v1081, 7
      %v1083 = vsub.s32 %v1072, %v1082
      %v1084 = vrot.slane %v1047, %v1083
      %v1085 = vlaneseq
      %v1086 = vshrl.u32 %v1085, 7
      %v1087 = vsub.s32 %v1072, %v1086
      %v1088 = vrot.slane %v1050, %v1087
      %v1089 = vlaneseq
      %v1090 = vshrl.u32 %v1089, 7
      %v1091 = vsub.s32 %v1072, %v1090
      %v1092 = vrot.slane %v1053, %v1091
      %v1093 = vlaneseq
      %v1094 = vshrl.u32 %v1093, 7
      %v1095 = vsub.s32 %v1072, %v1094
      %v1096 = vrot.slane %v1056, %v1095
      %v1097 = vlaneseq
      %v1098 = vshrl.u32 %v1097, 7
      %v1099 = vsub.s32 %v1072, %v1098
      %v1100 = vrot.slane %v1059, %v1099
      %v1101 = vlaneseq
      %v1102 = vshrl.u32 %v1101, 7
      %v1103 = vsub.s32 %v1072, %v1102
      %v1104 = vrot.slane %v1062, %v1103
      %vm1105 = vcmask 1041409
      %v1106 = vsel %vm1105, %v1080, %v1076
      %vm1107 = vcmask 1042434
      %v1108 = vsel %vm1107, %v1084, %v1106
      %vm1109 = vcmask 1043459
      %v1110 = vsel %vm1109, %v1088, %v1108
      %vm1111 = vcmask 1044484
      %v1112 = vsel %vm1111, %v1092, %v1110
      %vm1113 = vcmask 1045509
      %v1114 = vsel %vm1113, %v1096, %v1112
      %vm1115 = vcmask 1046534
      %v1116 = vsel %vm1115, %v1100, %v1114
      %vm1117 = vcmask 1047559
      %v1118 = vsel %vm1117, %v1104, %v1116
      %vm1120 = vcmask 64512
      %v1121 = vsel %vm1120, %v1118, 0.0
      %1122 = vadd.xlane.f32.xlu0 %v1121
      %v1123 = vpop.xlane.xlu0 %1122
      %v1124 = vmul.f32 %v1123, 0.125
      %vm1125 = vcmask 7168
      %1126 = vst.msk [vmem:[%s327] sm:$0xff] %vm1125, %v1124
      %p1127 = scmp.lt.s32.totalorder %s19, 3
      %s1128 = scalar_select %p1127, %s19, 3
      %s1129 = smul.addr %s1128, 8
      %s1130 = scalar_lea.vmem %s8, %s1129
      // Predicated region
      $region53: #{tpu_custom_call.1} parent=51 // pred_check
        %p1131 = pneg %p215
      $region54: #{tpu_custom_call.1} parent=51 // pred_check_branch
        %1133 = sbr.rel (%p1131) target = $region56
      $region55: #{tpu_custom_call.1} parent=51 // pred_region
        _
      $region56: #{tpu_custom_call.1} parent=51 // pred_fallthru
        _
    $region52: #{tpu_custom_call.1} parent=5 // pred_fallthru
      _
    %p1134 = scmp.le.s32.totalorder 2, %s14
    // Predicated region
    $region57: #{tpu_custom_call.1} parent=5 // pred_check
      %p1135 = pneg %p1134
    $region58: #{tpu_custom_call.1} parent=5 // pred_check_branch
      %1137 = sbr.rel (%p1135) target = $region60
    $region59: #{tpu_custom_call.1} parent=5 // pred_region
      %s1138 = ssub.s32 %s14, 2
      // Predicated region
      $region61: #{tpu_custom_call.1} parent=59 // pred_check
        %p1139 = pneg %p221
      $region62: #{tpu_custom_call.1} parent=59 // pred_check_branch
        %1141 = sbr.rel (%p1139) target = $region64
      $region63: #{tpu_custom_call.1} parent=59 // pred_region
        %p1142 = scmp.lt.s32.totalorder %s20, 3
        %s1143 = scalar_select %p1142, %s20, 3
        %s1144 = smul.addr %s1143, 8
        %s1145 = scalar_lea.vmem %s8, %s1144
      $region64: #{tpu_custom_call.1} parent=59 // pred_fallthru
        _
    $region60: #{tpu_custom_call.1} parent=5 // pred_fallthru
      _
  $region6: #{tpu_custom_call.1} parent=0 // loop_footer
    %s18 = sadd.s32 1, %s14
  $region7: #{tpu_custom_call.1} parent=0 // loop_footer_branch
    %13 = sbr.rel target = $region3
  $region8: #{tpu_custom_call.1} parent=0 // loop_exit
    _

</llo_original>
